<compile_context>
chip_gen: v6e
topology: v6e:2x2x1
jax: 0.10.0
libtpu: 0.0.40
codegen_flags: <defaults>
</compile_context>

<pallas_src>
import math

import jax
import jax.numpy as jnp
from jax import lax
from jax.experimental import pallas as pl
from jax.experimental.pallas import tpu as pltpu


# ----------------------------------------------------------------------------- kernel
def _upconv_kernel(x_ref, ryc_ref, gp_ref, btail_ref, o_ref, tap_ref):
    """Fused bilinear-upsample + KxK conv for one (batch, row-tile) grid step.

    x_ref     : (1, in_h, in_w*Cin)          bf16  input slab (channels in lanes)
    ryc_ref   : (tile_h, k_pad)              bf16  concat'd vertical interp taps + ones col
    gp_ref    : (KH, in_w*Cin, out_w*Cout)   bf16  horiz-interp (+) conv-tap operators
    btail_ref : (k_pad - KH*in_h, out_w*Cout) bf16 bias row followed by zero pad rows
    o_ref     : (1, tile_h, out_w*Cout)            lane-dense output slab
    tap_ref   : (k_pad, out_w*Cout)          bf16  per-batch VMEM cache of tap products
    """
    kh_taps = gp_ref.shape[0]
    in_h = x_ref.shape[1]
    k_taps = kh_taps * in_h

    # Per-batch work: depends only on the batch index, so compute it once per batch
    # (row-tile grid axis is "arbitrary" so this initializer always precedes reuse).
    @pl.when(pl.program_id(1) == 0)
    def _():
        x = x_ref[0]                                              # (in_h, in_w*Cin) bf16
        for kh in range(kh_taps):                                 # static unroll (KH = 3)
            t = jnp.dot(x, gp_ref[kh],                            # bf16 x bf16 MXU
                        preferred_element_type=jnp.float32)       # (in_h, out_w*Cout) f32
            tap_ref[kh * in_h:(kh + 1) * in_h, :] = t.astype(tap_ref.dtype)
        tap_ref[k_taps:, :] = btail_ref[...]                      # bias row + zero pad

    # Single fused vertical matmul: vertical interp + 3-tap sum + bias, f32 accumulation.
    o_ref[0] = jnp.dot(ryc_ref[...], tap_ref[...],
                       preferred_element_type=jnp.float32).astype(o_ref.dtype)


# --------------------------------------------------------------------------- operators
def _interp_matrix(out_size, in_size):
    """R (out_size, in_size): PyTorch bilinear (align_corners=False) along one axis."""
    scale = in_size / out_size
    src = (jnp.arange(out_size, dtype=jnp.float32) + 0.5) * scale - 0.5
    src = jnp.clip(src, 0.0, in_size - 1)
    lo = jnp.floor(src).astype(jnp.int32)
    hi = jnp.minimum(lo + 1, in_size - 1)
    frac = src - lo.astype(jnp.float32)
    oh_lo = jax.nn.one_hot(lo, in_size, dtype=jnp.float32)
    oh_hi = jax.nn.one_hot(hi, in_size, dtype=jnp.float32)
    return oh_lo * (1.0 - frac)[:, None] + oh_hi * frac[:, None]


# ----------------------------------------------------------------------- tile planning
def _round_up(v, m):
    return -(-v // m) * m


def _vmem_capacity_bytes():
    """Per-TensorCore physical VMEM; falls back to the v7x floor (64 MiB)."""
    cap = 64 * 1024 * 1024
    try:
        info = pltpu.get_tpu_info()
        attr = getattr(info, "vmem_capacity_bytes", None)
        if attr:
            cap = int(attr)
    except Exception:  # pragma: no cover - conservative fallback off-TPU
        pass
    return cap


def _footprint_bytes(tile_h, in_h, lanes_in, lanes_out, kh, k_pad, out_itemsize):
    """Honest VMEM estimate: 2x-buffered blocks + scratch, lane/sublane padded."""
    def padded(rows, lanes, itemsize):
        sub = 8 if itemsize >= 4 else 16
        return _round_up(max(rows, 1), sub) * _round_up(lanes, 128) * itemsize
    bf = 2
    x_blk = 2 * padded(in_h, lanes_in, bf)
    ryc_blk = 2 * padded(tile_h, k_pad, bf)
    gp_blk = 2 * kh * padded(lanes_in, lanes_out, bf)
    bt_blk = 2 * padded(k_pad - kh * in_h, lanes_out, bf)
    o_blk = 2 * padded(tile_h, lanes_out, out_itemsize)
    scratch = padded(k_pad, lanes_out, bf)
    return x_blk + ryc_blk + gp_blk + bt_blk + o_blk + scratch


def _plan_tiles(n_batch, out_h, in_h, lanes_in, lanes_out, kh, k_pad, out_itemsize,
                max_tile_h=256):
    cap = _vmem_capacity_bytes()
    vmem_limit = min(cap // 2, 64 * 1024 * 1024)
    budget = int(vmem_limit * 0.75)

    cands = sorted({t for t in range(8, out_h + 1, 8) if out_h % t == 0} | {out_h},
                   reverse=True)
    small = [t for t in cands if t <= max_tile_h]
    cands = small if small else [min(cands)]

    # v7x has 2 TensorCores: make sure the grid has >= 2 steps when batch == 1.
    if n_batch == 1:
        split = [t for t in cands if out_h // t >= 2]
        if split:
            cands = split

    for t in cands:
        if _footprint_bytes(t, in_h, lanes_in, lanes_out, kh, k_pad,
                            out_itemsize) <= budget:
            return t, vmem_limit
    return cands[-1], vmem_limit


# ----------------------------------------------------------------------------- wrapper
def upsample_conv(x_nchw, shape, weight_oihw, bias, padding=1,
                  out_dtype=None, channels_last=False, max_tile_h=256):
    """UpsampleConv.forward: bilinear upsample to `shape`, then Conv2d(k, pad)."""
    out_h, out_w = shape
    N, Cin, in_h, in_w = x_nchw.shape
    Cout, _, KH, KW = weight_oihw.shape
    if out_dtype is None:
        out_dtype = x_nchw.dtype        # bf16 here would halve output HBM writeback

    lanes_in = in_w * Cin
    lanes_out = out_w * Cout
    k_taps = KH * in_h
    k_pad = _round_up(k_taps + 1, 8)    # +1 bias row, padded to a sublane multiple

    # --- small structured operators, built once in f32 then truncated to bf16 ---------
    ry = _interp_matrix(out_h, in_h)                                   # (out_h, in_h)
    rx = _interp_matrix(out_w, in_w)                                   # (out_w, in_w)
    rxc = jnp.kron(rx.T, jnp.eye(Cin, dtype=jnp.float32))              # (in_w*Cin, out_w*Cin)
    w32 = weight_oihw.astype(jnp.float32)
    # gp[kh] = rxc @ g[kh]: horizontal interp folded into the (kw, ci)->co conv operator.
    gp = jnp.stack([
        rxc @ sum(jnp.kron(jnp.eye(out_w, k=padding - kw, dtype=jnp.float32),
                           w32[:, :, kh, kw].T) for kw in range(KW))
        for kh in range(KH)])                                          # (KH, lanes_in, lanes_out)

    # Vertical interp with the conv's vertical tap shift (+ zero pad) baked in, all KH
    # taps concatenated along the contraction axis, plus a ones column for the bias row.
    ry_pad = jnp.pad(ry, ((padding, padding), (0, 0)))
    ryc = jnp.zeros((out_h, k_pad), jnp.float32)
    for kh in range(KH):
        ryc = ryc.at[:, kh * in_h:(kh + 1) * in_h].set(ry_pad[kh:kh + out_h])
    ryc = ryc.at[:, k_taps].set(1.0)                                   # bias column

    btail = jnp.zeros((k_pad - k_taps, lanes_out), jnp.float32)
    btail = btail.at[0].set(jnp.tile(bias.astype(jnp.float32), out_w))

    # --- lane-dense slabs, bf16 HBM/VMEM data path -------------------------------------
    x_slab = jnp.transpose(x_nchw, (0, 2, 3, 1)).reshape(
        N, in_h, lanes_in).astype(jnp.bfloat16)
    gp = gp.astype(jnp.bfloat16)
    ryc = ryc.astype(jnp.bfloat16)
    btail = btail.astype(jnp.bfloat16)

    tile_h, vmem_limit = _plan_tiles(N, out_h, in_h, lanes_in, lanes_out, KH, k_pad,
                                     jnp.dtype(out_dtype).itemsize, max_tile_h)
    grid = (N, out_h // tile_h)

    out_slab = pl.pallas_call(
        _upconv_kernel,
        out_shape=jax.ShapeDtypeStruct((N, out_h, lanes_out), out_dtype),
        grid_spec=pltpu.PrefetchScalarGridSpec(
            num_scalar_prefetch=0,
            grid=grid,
            in_specs=[
                pl.BlockSpec((1, in_h, lanes_in), lambda n, i: (n, 0, 0)),
                pl.BlockSpec((tile_h, k_pad), lambda n, i: (i, 0)),
                pl.BlockSpec((KH, lanes_in, lanes_out), lambda n, i: (0, 0, 0)),
                pl.BlockSpec((k_pad - k_taps, lanes_out), lambda n, i: (0, 0)),
            ],
            out_specs=pl.BlockSpec((1, tile_h, lanes_out), lambda n, i: (n, i, 0)),
            scratch_shapes=[pltpu.VMEM((k_pad, lanes_out), jnp.bfloat16)],
        ),
        compiler_params=pltpu.CompilerParams(
            # batch axis "parallel" (megacore); row-tile axis "arbitrary" so the
            # @pl.when(i == 0) tap-cache initializer cannot be split from its readers.
            dimension_semantics=("parallel", "arbitrary"),
            vmem_limit_bytes=vmem_limit,
        ),
    )(x_slab, ryc, gp, btail)

    out = out_slab.reshape(N, out_h, out_w, Cout)
    if channels_last:
        return out                                                   # lane-dense NHWC
    return jnp.transpose(out, (0, 3, 1, 2))                          # NCHW (module semantics)


# --------------------------------------------------------------------------- reference
def _bilinear_corner_gather(x_nchw, out_h, out_w):
    """Neighbor gathers / fractions for PyTorch bilinear (align_corners=False)."""
    _, _, H, W = x_nchw.shape

    def coords(out_size, in_size):
        scale = in_size / out_size
        src = (jnp.arange(out_size, dtype=jnp.float32) + 0.5) * scale - 0.5
        src = jnp.clip(src, 0.0, in_size - 1)
        lo = jnp.floor(src).astype(jnp.int32)
        hi = jnp.minimum(lo + 1, in_size - 1)
        frac = src - lo.astype(jnp.float32)
        return lo, hi, frac

    y0, y1, fy = coords(out_h, H)
    x0, x1, fx = coords(out_w, W)
    top = x_nchw[:, :, y0, :]
    bot = x_nchw[:, :, y1, :]
    return top[:, :, :, x0], top[:, :, :, x1], bot[:, :, :, x0], bot[:, :, :, x1], fy, fx


def _reference(x_nchw, shape, weight_oihw, bias):
    """Plain-JAX reference: bilinear upsample + conv, for sanity checking."""
    out_h, out_w = shape
    tl, tr, bl, br, fy, fx = _bilinear_corner_gather(x_nchw, out_h, out_w)
    fx_ = fx[None, None, None, :]
    fy_ = fy[None, None, :, None]
    top = tl * (1 - fx_) + tr * fx_
    bot = bl * (1 - fx_) + br * fx_
    up = top * (1 - fy_) + bot * fy_
    y = lax.conv_general_dilated(
        up.astype(jnp.float32), weight_oihw.astype(jnp.float32),
        window_strides=(1, 1), padding=((1, 1), (1, 1)),
        dimension_numbers=("NCHW", "OIHW", "NCHW"))
    return y + bias[None, :, None, None]


if __name__ == "__main__":
    key = jax.random.PRNGKey(0)
    k_w, k_b, k_x = jax.random.split(key, 3)

    N, Cin, Cout = 2, 4, 4
    H_in, W_in = 8, 8
    target_shape = (16, 16)

    # Conv2d(in=4, out=4, kernel=3, padding=1) parameters, PyTorch-style init.
    fan_in = Cin * 3 * 3
    bound = 1.0 / math.sqrt(fan_in)
    weight = jax.random.uniform(k_w, (Cout, Cin, 3, 3), jnp.float32, -bound, bound)
    bias = jax.random.uniform(k_b, (Cout,), jnp.float32, -bound, bound)

    x = jax.random.normal(k_x, (N, Cin, H_in, W_in), dtype=jnp.float32)
    y_ref = jax.block_until_ready(_reference(x, target_shape, weight, bias))

    # Default tiling (single row tile per batch element).
    y = jax.block_until_ready(upsample_conv(x, target_shape, weight, bias))
    assert y.shape == (N, Cout, target_shape[0], target_shape[1]), y.shape
    assert jnp.allclose(y, y_ref, rtol=1e-2, atol=1e-2), float(
        jnp.max(jnp.abs(y - y_ref)))

    # Forced multi-row-tile path: exercises the per-batch tap cache (@pl.when(i == 0)).
    y2 = jax.block_until_ready(
        upsample_conv(x, target_shape, weight, bias, max_tile_h=8))
    assert jnp.allclose(y2, y_ref, rtol=1e-2, atol=1e-2), float(
        jnp.max(jnp.abs(y2 - y_ref)))

    print("KERNEL_OK")
</pallas_src>

<mosaic_0001>
module attributes {stable_mosaic.version = 11 : i64} {
  func.func @_upconv_kernel(%arg0: i32, %arg1: i32, %arg2: memref<1x8x32xbf16, #tpu.memory_space<vmem>>, %arg3: memref<16x32xbf16, #tpu.memory_space<vmem>>, %arg4: memref<3x32x64xbf16, #tpu.memory_space<vmem>>, %arg5: memref<8x64xbf16, #tpu.memory_space<vmem>>, %arg6: memref<1x16x64xf32, #tpu.memory_space<vmem>>, %arg7: memref<32x64xbf16, #tpu.memory_space<vmem>>) attributes {dimension_semantics = [#tpu.dimension_semantics<parallel>, #tpu.dimension_semantics<arbitrary>], iteration_bounds = array<i64: 2, 1>, scalar_prefetch = 0 : i64, scratch_operands = 1 : i64, tpu.core_type = #tpu.core_type<tc>, window_params = [{transform_indices = @transform_0, window_bounds = array<i64: 1, 8, 32>}, {transform_indices = @transform_1, window_bounds = array<i64: 16, 32>}, {pipeline_mode = #tpu.pipeline_mode<synchronous>, transform_indices = @transform_2, window_bounds = array<i64: 3, 32, 64>}, {pipeline_mode = #tpu.pipeline_mode<synchronous>, transform_indices = @transform_3, window_bounds = array<i64: 8, 64>}, {transform_indices = @transform_4, window_bounds = array<i64: 1, 16, 64>}]} {
    %c0_i32 = arith.constant 0 : i32
    %0 = arith.cmpi eq, %arg1, %c0_i32 : i32
    %1 = arith.extui %0 : i1 to i32
    %c0_i32_0 = arith.constant 0 : i32
    %2 = arith.cmpi ne, %1, %c0_i32_0 : i32
    scf.if %2 {
      %c0_7 = arith.constant 0 : index
      %c0_8 = arith.constant 0 : index
      %c0_9 = arith.constant 0 : index
      %9 = vector.load %arg2[%c0_7, %c0_8, %c0_9] : memref<1x8x32xbf16, #tpu.memory_space<vmem>>, vector<1x8x32xbf16>
      %10 = vector.shape_cast %9 : vector<1x8x32xbf16> to vector<8x32xbf16>
      %c0_10 = arith.constant 0 : index
      %c0_11 = arith.constant 0 : index
      %c0_12 = arith.constant 0 : index
      %11 = vector.load %arg4[%c0_10, %c0_11, %c0_12] : memref<3x32x64xbf16, #tpu.memory_space<vmem>>, vector<1x32x64xbf16>
      %12 = vector.shape_cast %11 : vector<1x32x64xbf16> to vector<32x64xbf16>
      %cst_13 = arith.constant dense<0.000000e+00> : vector<8x64xf32>
      %13 = tpu.matmul %10, %12, %cst_13 {dimension_numbers = #tpu.dot_dimension_numbers<[1], [0], [0], [1], [0, 0, 1, 1], [], []>} : vector<8x32xbf16>, vector<32x64xbf16>, vector<8x64xf32> -> vector<8x64xf32>
      %14 = arith.truncf %13 : vector<8x64xf32> to vector<8x64xbf16>
      %c0_14 = arith.constant 0 : index
      %c0_15 = arith.constant 0 : index
      %15 = vector.load %arg7[%c0_14, %c0_15] : memref<32x64xbf16, #tpu.memory_space<vmem>>, vector<8x64xbf16>
      tpu.vector_store %arg7[%c0_14, %c0_15], %14 {strides = array<i32>} : memref<32x64xbf16, #tpu.memory_space<vmem>>, vector<8x64xbf16>,
      %c1 = arith.constant 1 : index
      %c0_16 = arith.constant 0 : index
      %c0_17 = arith.constant 0 : index
      %16 = vector.load %arg4[%c1, %c0_16, %c0_17] : memref<3x32x64xbf16, #tpu.memory_space<vmem>>, vector<1x32x64xbf16>
      %17 = vector.shape_cast %16 : vector<1x32x64xbf16> to vector<32x64xbf16>
      %cst_18 = arith.constant dense<0.000000e+00> : vector<8x64xf32>
      %18 = tpu.matmul %10, %17, %cst_18 {dimension_numbers = #tpu.dot_dimension_numbers<[1], [0], [0], [1], [0, 0, 1, 1], [], []>} : vector<8x32xbf16>, vector<32x64xbf16>, vector<8x64xf32> -> vector<8x64xf32>
      %19 = arith.truncf %18 : vector<8x64xf32> to vector<8x64xbf16>
      %c8 = arith.constant 8 : index
      %c0_19 = arith.constant 0 : index
      %20 = vector.load %arg7[%c8, %c0_19] : memref<32x64xbf16, #tpu.memory_space<vmem>>, vector<8x64xbf16>
      tpu.vector_store %arg7[%c8, %c0_19], %19 {strides = array<i32>} : memref<32x64xbf16, #tpu.memory_space<vmem>>, vector<8x64xbf16>,
      %c2 = arith.constant 2 : index
      %c0_20 = arith.constant 0 : index
      %c0_21 = arith.constant 0 : index
      %21 = vector.load %arg4[%c2, %c0_20, %c0_21] : memref<3x32x64xbf16, #tpu.memory_space<vmem>>, vector<1x32x64xbf16>
      %22 = vector.shape_cast %21 : vector<1x32x64xbf16> to vector<32x64xbf16>
      %cst_22 = arith.constant dense<0.000000e+00> : vector<8x64xf32>
      %23 = tpu.matmul %10, %22, %cst_22 {dimension_numbers = #tpu.dot_dimension_numbers<[1], [0], [0], [1], [0, 0, 1, 1], [], []>} : vector<8x32xbf16>, vector<32x64xbf16>, vector<8x64xf32> -> vector<8x64xf32>
      %24 = arith.truncf %23 : vector<8x64xf32> to vector<8x64xbf16>
      %c16 = arith.constant 16 : index
      %c0_23 = arith.constant 0 : index
      %25 = vector.load %arg7[%c16, %c0_23] : memref<32x64xbf16, #tpu.memory_space<vmem>>, vector<8x64xbf16>
      tpu.vector_store %arg7[%c16, %c0_23], %24 {strides = array<i32>} : memref<32x64xbf16, #tpu.memory_space<vmem>>, vector<8x64xbf16>,
      %c0_24 = arith.constant 0 : index
      %c0_25 = arith.constant 0 : index
      %26 = vector.load %arg5[%c0_24, %c0_25] : memref<8x64xbf16, #tpu.memory_space<vmem>>, vector<8x64xbf16>
      %c24 = arith.constant 24 : index
      %c0_26 = arith.constant 0 : index
      %27 = vector.load %arg7[%c24, %c0_26] : memref<32x64xbf16, #tpu.memory_space<vmem>>, vector<8x64xbf16>
      tpu.vector_store %arg7[%c24, %c0_26], %26 {strides = array<i32>} : memref<32x64xbf16, #tpu.memory_space<vmem>>, vector<8x64xbf16>,
    } else {
    }
    %c0 = arith.constant 0 : index
    %c0_1 = arith.constant 0 : index
    %3 = vector.load %arg3[%c0, %c0_1] : memref<16x32xbf16, #tpu.memory_space<vmem>>, vector<16x32xbf16>
    %c0_2 = arith.constant 0 : index
    %c0_3 = arith.constant 0 : index
    %4 = vector.load %arg7[%c0_2, %c0_3] : memref<32x64xbf16, #tpu.memory_space<vmem>>, vector<32x64xbf16>
    %cst = arith.constant dense<0.000000e+00> : vector<16x64xf32>
    %5 = tpu.matmul %3, %4, %cst {dimension_numbers = #tpu.dot_dimension_numbers<[1], [0], [0], [1], [0, 0, 1, 1], [], []>} : vector<16x32xbf16>, vector<32x64xbf16>, vector<16x64xf32> -> vector<16x64xf32>
    %c0_4 = arith.constant 0 : index
    %c0_5 = arith.constant 0 : index
    %c0_6 = arith.constant 0 : index
    %6 = vector.load %arg6[%c0_4, %c0_5, %c0_6] : memref<1x16x64xf32, #tpu.memory_space<vmem>>, vector<1x16x64xf32>
    %7 = vector.shape_cast %6 : vector<1x16x64xf32> to vector<16x64xf32>
    %8 = vector.shape_cast %5 : vector<16x64xf32> to vector<1x16x64xf32>
    tpu.vector_store %arg6[%c0_4, %c0_5, %c0_6], %8 {strides = array<i32>} : memref<1x16x64xf32, #tpu.memory_space<vmem>>, vector<1x16x64xf32>,
    return
  }
  func.func @transform_0(%arg0: i32, %arg1: i32) -> (i32, i32, i32) {
    %c0_i32 = arith.constant 0 : i32
    %c0_i32_0 = arith.constant 0 : i32
    %c0_i32_1 = arith.constant 0 : i32
    return %arg0, %c0_i32, %c0_i32_0 : i32, i32, i32
  }
  func.func @transform_1(%arg0: i32, %arg1: i32) -> (i32, i32) {
    %c0_i32 = arith.constant 0 : i32
    %c0_i32_0 = arith.constant 0 : i32
    return %arg1, %c0_i32 : i32, i32
  }
  func.func @transform_2(%arg0: i32, %arg1: i32) -> (i32, i32, i32) {
    %c0_i32 = arith.constant 0 : i32
    %c0_i32_0 = arith.constant 0 : i32
    %c0_i32_1 = arith.constant 0 : i32
    %c0_i32_2 = arith.constant 0 : i32
    return %c0_i32, %c0_i32_0, %c0_i32_1 : i32, i32, i32
  }
  func.func @transform_3(%arg0: i32, %arg1: i32) -> (i32, i32) {
    %c0_i32 = arith.constant 0 : i32
    %c0_i32_0 = arith.constant 0 : i32
    %c0_i32_1 = arith.constant 0 : i32
    return %c0_i32, %c0_i32_0 : i32, i32
  }
  func.func @transform_4(%arg0: i32, %arg1: i32) -> (i32, i32, i32) {
    %c0_i32 = arith.constant 0 : i32
    %c0_i32_0 = arith.constant 0 : i32
    return %arg0, %arg1, %c0_i32 : i32, i32, i32
  }
}

</mosaic_0001>

<llo_original>
// kernel: tpu_custom_call.1
$region0: #{tpu_custom_call.1}
  #allocation0 [shape = 'u32[]', space=smem, size = 0x4, offset = 0x4, fixed_abs, tag = 'smem constant byte address 0x4 - core index']
  #allocation1 [shape = 'u32[144,128]{1,0:T(1,128)}', space=vmem, size = 0x12000, scoped, tag = 'internal scratch']
  #allocation2 [shape = 'bf16[32,64]{1,0:T(8,128)(2,1)}', space=vmem, size = 0x2000, scoped, tag = 'scratch operand']
  %s0 = inlined_call_operand.hbm [shape: bf16[2,8,32], index: 0, kind: input, shape index: {}]
  %s1 = inlined_call_operand.hbm [shape: bf16[16,32], index: 1, kind: input, shape index: {}]
  %s2 = inlined_call_operand.hbm [shape: bf16[3,32,64], index: 2, kind: input, shape index: {}]
  %s3 = inlined_call_operand.vmem [shape: bf16[8,64], index: 3, kind: input, shape index: {}]
  %s4 = inlined_call_operand.hbm [shape: f32[2,16,64], index: 4, kind: output, shape index: {}]
  %s5 = sld [smem:[#allocation0]]
  $region65: #{tpu_custom_call.1} parent=0
    _
  %s7 = ssub.s32 1, %s5
  %s8 = scalar_select 0, %s7, %s5
  $region1: #{tpu_custom_call.1} parent=0
    #allocation3 [shape = 'u8[4096]{0}', space=vmem, size = 0x1000, scoped, tag = 'input window, operand 0']
    #allocation4 [shape = 's32[2]{0}', space=sflag, size = 0x8, scoped, tag = 'scoped memory for tpu_custom_call.1']
    #allocation5 [shape = 's32[2]{0}', space=sflag, size = 0x8, scoped, tag = 'scoped memory for tpu_custom_call.1']
    #allocation6 [shape = 'u8[4096]{0}', space=vmem, size = 0x1000, scoped, tag = 'input window, operand 1, single buffered']
    #allocation7 [shape = 's32[1]{0}', space=sflag, size = 0x4, scoped, tag = 'scoped memory for tpu_custom_call.1']
    #allocation8 [shape = 'u8[24576]{0}', space=vmem, size = 0x6000, scoped, tag = 'input window, operand 2, single buffered']
    #allocation9 [shape = 'u8[16384]{0}', space=vmem, size = 0x4000, scoped, tag = 'output window, operand 0']
    %9 = vsyncpa [#allocation4], 0
    %s10 = scalar_lea.sflag [#allocation4], 1
    %11 = vsyncpa %s10, 0
    %12 = vsyncpa [#allocation7], 0
    %13 = vsyncpa [#allocation5], 0
    %s14 = scalar_lea.sflag [#allocation5], 1
    %15 = vsyncpa %s14, 0
    loop: start=0, step=1, limit=4
    $region2: #{tpu_custom_call.1} parent=1 // loop_pre_header
      _
    $region3: #{tpu_custom_call.1} parent=1 // loop_header
      %s17 = sphi 0, %s21
      %p18 = scmp.ge.s32.totalorder %s17, 4
      %s24 = sphi 0, %s36
      %s25 = sphi 0, %s32
      %s26 = sphi 0, %s24
      %s27 = sphi 0, %s25
      %s28 = sphi 0, %s26
      %s29 = sphi 0, %s27
      %s39 = sphi 0, %s41
      %s42 = sphi 0, %s39
      %s43 = sphi 0, %s42
      %s59 = sphi 0, %s43
      %s65 = sphi 0, %s67
      %s68 = sphi 0, %s65
      %s69 = sphi 0, %s68
      %s85 = sphi 0, %s69
      %s89 = sphi 0, %s89
      %s91 = sphi 0, %s89
      %s92 = sphi 0, %s91
      %s106 = sphi 0, %s92
      %s110 = sphi 0, %s110
      %s112 = sphi 0, %s110
      %s113 = sphi 0, %s112
      %s127 = sphi 0, %s113
      %s135 = sphi 0, %s137
      %s138 = sphi 0, %s135
      %s139 = sphi 0, %s138
      %s155 = sphi 0, %s139
    $region4: #{tpu_custom_call.1} parent=1 // loop_header_branch
      %20 = sbr.rel (%p18) target = $region8
    $region5: #{tpu_custom_call.1} parent=1 // loop_body
      %s22 = ssub.s32 %s17, 1
      %s23 = ssub.s32 %s17, 2
      %s30 = sadd.s32 1, %s25
      %p31 = scmp.ge.s32.totalorder %s30, 1
      %s32 = scalar_select %p31, 0, %s30
      %s33 = sadd.s32 1, %s24
      %s34 = scalar_select %p31, %s33, %s24
      %p35 = scmp.ge.s32.totalorder %s34, 2
      %s36 = scalar_select %p35, 0, %s34
      %s37 = ssub.s32 %s24, %s36
      %p38 = scmp.eq.s32.totalorder %s37, 0
      %s40 = sadd.s32 %s39, 1
      %s41 = scalar_select %p38, %s39, %s40
      %p44 = pneg %p38
      %p45 = scmp.eq.s32.totalorder %s17, 1
      %p46 = por %p44, %p45
      %p47 = scmp.ne.s32.totalorder %s39, %s42
      %p48 = scmp.eq.s32.totalorder %s17, 0
      %p49 = por %p47, %p48
      %p50 = scmp.ne.s32.totalorder %s39, %s42
      %p51 = scmp.eq.s32.totalorder %s22, 1
      %p52 = por %p50, %p51
      %p53 = scmp.ne.s32.totalorder %s42, %s43
      %p54 = scmp.eq.s32.totalorder %s22, 0
      %p55 = por %p53, %p54
      %p56 = scmp.ne.s32.totalorder %s42, %s43
      %p57 = scmp.eq.s32.totalorder %s23, 1
      %p58 = por %p56, %p57
      %p60 = scmp.ne.s32.totalorder %s43, %s59
      %p61 = scmp.eq.s32.totalorder %s23, 0
      %p62 = por %p60, %p61
      %s63 = ssub.s32 %s25, %s32
      %p64 = scmp.eq.s32.totalorder %s63, 0
      %s66 = sadd.s32 %s65, 1
      %s67 = scalar_select %p64, %s65, %s66
      %p70 = pneg %p64
      %p71 = scmp.eq.s32.totalorder %s17, 1
      %p72 = por %p70, %p71
      %p73 = scmp.ne.s32.totalorder %s65, %s68
      %p74 = scmp.eq.s32.totalorder %s17, 0
      %p75 = por %p73, %p74
      %p76 = scmp.ne.s32.totalorder %s65, %s68
      %p77 = scmp.eq.s32.totalorder %s22, 1
      %p78 = por %p76, %p77
      %p79 = scmp.ne.s32.totalorder %s68, %s69
      %p80 = scmp.eq.s32.totalorder %s22, 0
      %p81 = por %p79, %p80
      %p82 = scmp.ne.s32.totalorder %s68, %s69
      %p83 = scmp.eq.s32.totalorder %s23, 1
      %p84 = por %p82, %p83
      %p86 = scmp.ne.s32.totalorder %s69, %s85
      %p87 = scmp.eq.s32.totalorder %s23, 0
      %p88 = por %p86, %p87
      %s90 = sadd.s32 %s89, 1
      %p93 = scmp.eq.s32.totalorder %s17, 1
      %p94 = scmp.ne.s32.totalorder %s89, %s91
      %p95 = scmp.eq.s32.totalorder %s17, 0
      %p96 = por %p94, %p95
      %p97 = scmp.ne.s32.totalorder %s89, %s91
      %p98 = scmp.eq.s32.totalorder %s22, 1
      %p99 = por %p97, %p98
      %p100 = scmp.ne.s32.totalorder %s91, %s92
      %p101 = scmp.eq.s32.totalorder %s22, 0
      %p102 = por %p100, %p101
      %p103 = scmp.ne.s32.totalorder %s91, %s92
      %p104 = scmp.eq.s32.totalorder %s23, 1
      %p105 = por %p103, %p104
      %p107 = scmp.ne.s32.totalorder %s92, %s106
      %p108 = scmp.eq.s32.totalorder %s23, 0
      %p109 = por %p107, %p108
      %s111 = sadd.s32 %s110, 1
      %p114 = scmp.eq.s32.totalorder %s17, 1
      %p115 = scmp.ne.s32.totalorder %s110, %s112
      %p116 = scmp.eq.s32.totalorder %s17, 0
      %p117 = por %p115, %p116
      %p118 = scmp.ne.s32.totalorder %s110, %s112
      %p119 = scmp.eq.s32.totalorder %s22, 1
      %p120 = por %p118, %p119
      %p121 = scmp.ne.s32.totalorder %s112, %s113
      %p122 = scmp.eq.s32.totalorder %s22, 0
      %p123 = por %p121, %p122
      %p124 = scmp.ne.s32.totalorder %s112, %s113
      %p125 = scmp.eq.s32.totalorder %s23, 1
      %p126 = por %p124, %p125
      %p128 = scmp.ne.s32.totalorder %s113, %s127
      %p129 = scmp.eq.s32.totalorder %s23, 0
      %p130 = por %p128, %p129
      %s131 = ssub.s32 %s24, %s36
      %s132 = ssub.s32 %s25, %s32
      %s133 = sor.u32 %s131, %s132
      %p134 = scmp.eq.s32.totalorder %s133, 0
      %s136 = sadd.s32 %s135, 1
      %s137 = scalar_select %p134, %s135, %s136
      %p140 = pneg %p134
      %p141 = scmp.eq.s32.totalorder %s17, 1
      %p142 = por %p140, %p141
      %p143 = scmp.ne.s32.totalorder %s135, %s138
      %p144 = scmp.eq.s32.totalorder %s17, 0
      %p145 = por %p143, %p144
      %p146 = scmp.ne.s32.totalorder %s135, %s138
      %p147 = scmp.eq.s32.totalorder %s22, 1
      %p148 = por %p146, %p147
      %p149 = scmp.ne.s32.totalorder %s138, %s139
      %p150 = scmp.eq.s32.totalorder %s22, 0
      %p151 = por %p149, %p150
      %p152 = scmp.ne.s32.totalorder %s138, %s139
      %p153 = scmp.eq.s32.totalorder %s23, 1
      %p154 = por %p152, %p153
      %p156 = scmp.ne.s32.totalorder %s139, %s155
      %p157 = scmp.eq.s32.totalorder %s23, 0
      %p158 = por %p156, %p157
      %p159 = scmp.le.s32.totalorder 1, %s17
      %p160 = scmp.lt.s32.totalorder %s17, 3
      %p161 = pnand %p159, %p160
      %p162 = pneg %p161
      // Predicated region
      $region9: #{tpu_custom_call.1} parent=5 // pred_check
        _
      $region10: #{tpu_custom_call.1} parent=5 // pred_check_branch
        %164 = sbr.rel (%p161) target = $region12
      $region11: #{tpu_custom_call.1} parent=5 // pred_region
        %s165 = ssub.s32 %s17, 1
        // Predicated region
        $region13: #{tpu_custom_call.1} parent=11 // pred_check
          %p166 = pneg %p81
        $region14: #{tpu_custom_call.1} parent=11 // pred_check_branch
          %168 = sbr.rel (%p166) target = $region16
        $region15: #{tpu_custom_call.1} parent=11 // pred_region
          %s169 = smul.u32 2, %s27
          %s171 = ssub.s32 128, 128
          %172 = vsyncadd [#allocation7], %s171
          %s173 = smul.addr %s169, 64
          %s174 = scalar_lea.hbm %s1, %s173
          %s175 = sshll.u32 [#allocation6], 4
          %s176 = int_to_ptr.vmem [resolvable:$true] %s175
          %181 = dma.hbm_to_vmem [thread:$0]  %s174, 128, %s176, [#allocation7], 64, 64, 4
        $region16: #{tpu_custom_call.1} parent=11 // pred_fallthru
          _
        // Predicated region
        $region17: #{tpu_custom_call.1} parent=11 // pred_check
          %p182 = pneg %p102
        $region18: #{tpu_custom_call.1} parent=11 // pred_check_branch
          %184 = sbr.rel (%p182) target = $region20
        $region19: #{tpu_custom_call.1} parent=11 // pred_region
          %s186 = ssub.s32 768, 768
          %187 = vsyncadd [#allocation7], %s186
          %s188 = sshll.u32 [#allocation8], 4
          %s189 = int_to_ptr.vmem [resolvable:$true] %s188
          %194 = dma.hbm_to_vmem [thread:$0]  %s2, 768, %s189, [#allocation7], 64, 64, 4
        $region20: #{tpu_custom_call.1} parent=11 // pred_fallthru
          _
        // Predicated region
        $region21: #{tpu_custom_call.1} parent=11 // pred_check
          %p195 = pneg %p123
        $region22: #{tpu_custom_call.1} parent=11 // pred_check_branch
          %197 = sbr.rel (%p195) target = $region24
        $region23: #{tpu_custom_call.1} parent=11 // pred_region
          _
        $region24: #{tpu_custom_call.1} parent=11 // pred_fallthru
          _
      $region12: #{tpu_custom_call.1} parent=5 // pred_fallthru
        _
      %p198 = scmp.lt.s32.totalorder %s17, 2
      // Predicated region
      $region25: #{tpu_custom_call.1} parent=5 // pred_check
        %p199 = pneg %p198
      $region26: #{tpu_custom_call.1} parent=5 // pred_check_branch
        %201 = sbr.rel (%p199) target = $region28
      $region27: #{tpu_custom_call.1} parent=5 // pred_region
        // Predicated region
        $region29: #{tpu_custom_call.1} parent=27 // pred_check
          %p202 = pneg %p49
        $region30: #{tpu_custom_call.1} parent=27 // pred_check_branch
          %204 = sbr.rel (%p202) target = $region32
        $region31: #{tpu_custom_call.1} parent=27 // pred_region
          %s205 = sand.u32 %s39, 1
          %s206 = scalar_lea.sflag [#allocation4], %s205
          %s207 = sand.u32 %s39, 1
          %s208 = smul.addr %s207, 4
          %s209 = scalar_lea.vmem [#allocation3], %s208
          %s211 = ssub.s32 64, 64
          %212 = vsyncadd %s206, %s211
          %s213 = smul.addr %s24, 64
          %s214 = scalar_lea.hbm %s0, %s213
          %s216 = sshll.u32 %s209, 4
          %s217 = int_to_ptr.vmem [resolvable:$true] %s216
          %219 = dma.hbm_to_vmem [thread:$0]  %s214, 64, %s217, %s206
        $region32: #{tpu_custom_call.1} parent=27 // pred_fallthru
          _
      $region28: #{tpu_custom_call.1} parent=5 // pred_fallthru
        _
      %p220 = scmp.le.s32.totalorder 1, %s17
      %p221 = scmp.lt.s32.totalorder %s17, 3
      %p222 = pnand %p220, %p221
      %p223 = pneg %p222
      // Predicated region
      $region33: #{tpu_custom_call.1} parent=5 // pred_check
        _
      $region34: #{tpu_custom_call.1} parent=5 // pred_check_branch
        %225 = sbr.rel (%p222) target = $region36
      $region35: #{tpu_custom_call.1} parent=5 // pred_region
        %s226 = ssub.s32 %s17, 1
        %s227 = sand.u32 %s42, 1
        %s228 = scalar_lea.sflag [#allocation4], %s227
        %s229 = sand.u32 %s42, 1
        %s230 = smul.addr %s229, 4
        %s231 = scalar_lea.vmem [#allocation3], %s230
        // Predicated region
        $region37: #{tpu_custom_call.1} parent=35 // pred_check
          %p232 = pneg %p55
        $region38: #{tpu_custom_call.1} parent=35 // pred_check_branch
          %234 = sbr.rel (%p232) target = $region40
        $region39: #{tpu_custom_call.1} parent=35 // pred_region
          %235 = dma.done %s228, 64
        $region40: #{tpu_custom_call.1} parent=35 // pred_fallthru
          _
        // Predicated region
        $region41: #{tpu_custom_call.1} parent=35 // pred_check
          %p236 = pneg %p81
        $region42: #{tpu_custom_call.1} parent=35 // pred_check_branch
          %238 = sbr.rel (%p236) target = $region44
        $region43: #{tpu_custom_call.1} parent=35 // pred_region
          %239 = dma.done [#allocation7], 128
        $region44: #{tpu_custom_call.1} parent=35 // pred_fallthru
          _
        // Predicated region
        $region45: #{tpu_custom_call.1} parent=35 // pred_check
          %p240 = pneg %p102
        $region46: #{tpu_custom_call.1} parent=35 // pred_check_branch
          %242 = sbr.rel (%p240) target = $region48
        $region47: #{tpu_custom_call.1} parent=35 // pred_region
          %243 = dma.done [#allocation7], 768
        $region48: #{tpu_custom_call.1} parent=35 // pred_fallthru
          _
        %s244 = sand.u32 %s42, 1
        %s245 = scalar_lea.sflag [#allocation4], %s244
        %s246 = sand.u32 %s42, 1
        %s247 = smul.addr %s246, 4
        %s248 = scalar_lea.vmem [#allocation3], %s247
        %p249 = pneg %p55
        %p250 = pneg %p52
        %p251 = pneg %p81
        %p252 = pneg %p78
        %p253 = pneg %p102
        %p254 = pneg %p99
        %p255 = pneg %p123
        %p256 = pneg %p120
        %p257 = pneg %p151
        %p258 = pneg %p148
        %s259 = sand.u32 %s138, 1
        %s260 = scalar_lea.sflag [#allocation5], %s259
        %s261 = sand.u32 %s138, 1
        %s262 = smul.addr %s261, 16
        %s263 = scalar_lea.vmem [#allocation9], %s262
        %s264 = smul.u32 2, %s27
        %s265 = smul.u32 2, %s27
        %p267 = scmp.eq.s32.totalorder %s27, 0
        // Predicated region
        $region49: #{tpu_custom_call.1} parent=35 // pred_check
          %p268 = pneg %p267
        $region50: #{tpu_custom_call.1} parent=35 // pred_check_branch
          %270 = sbr.rel (%p268) target = $region52
        $region51: #{tpu_custom_call.1} parent=35 // pred_region
          %v271 = vld [vmem:[%s231] sm:$0xf]
          %v272 = vld [vmem:[#allocation8] sm:$0xf]
          %v273 = vld [vmem:[#allocation8 + $0x4] sm:$0xf]
          %v274 = vld [vmem:[#allocation8 + $0x8] sm:$0xf]
          %v275 = vld [vmem:[#allocation8 + $0xc] sm:$0xf]
          %v280 = vunpack.c.l.b16 %v272
          %v281 = vunpack.c.l.b16 %v273
          %v282 = vunpack.c.l.b16 %v274
          %v283 = vunpack.c.l.b16 %v275
          %v284 = vpack.c.b16 %v281, %v280
          %v285 = vpack.c.b16 %v283, %v282
          %vm288 = vcmask 261120
          %v290 = vsel %vm288, %v271, 0
          %292 = vmatprep.subr.bf16.mxu0 0
          %293 = vmatpush1.bf16.msra.mxu0 0
          %294 = vmatprep.subr.bf16.mxu0 0
          %295 = vmatpush1.bf16.msra.mxu0 0
          %296 = vmatprep.subr.bf16.mxu0 0
          %297 = vmatpush1.bf16.msra.mxu0 0
          %298 = vmatprep.subr.bf16.mxu0 0
          %299 = vmatpush1.bf16.msra.mxu0 0
          %300 = vmatprep.subr.bf16.mxu0 0
          %301 = vmatpush1.bf16.msra.mxu0 0
          %302 = vmatprep.subr.bf16.mxu0 0
          %303 = vmatpush1.bf16.msra.mxu0 0
          %304 = vmatprep.subr.bf16.mxu0 0
          %305 = vmatpush1.bf16.msra.mxu0 %v285
          %306 = vmatprep.subr.bf16.mxu0 0
          %307 = vmatpush1.bf16.msra.mxu0 %v284
          %308 = vmatprep.subr.bf16.mxu0 0
          %309 = vmatpush2.bf16.msra.mxu0 0
          %310 = vmatprep.subr.bf16.mxu0 0
          %311 = vmatpush2.bf16.msra.mxu0 0
          %312 = vmatprep.subr.bf16.mxu0 0
          %313 = vmatpush2.bf16.msra.mxu0 0
          %314 = vmatprep.subr.bf16.mxu0 0
          %315 = vmatpush2.bf16.msra.mxu0 0
          %316 = vmatprep.subr.bf16.mxu0 0
          %317 = vmatpush2.bf16.msra.mxu0 0
          %318 = vmatprep.subr.bf16.mxu0 0
          %319 = vmatpush2.bf16.msra.mxu0 0
          %320 = vmatprep.subr.bf16.mxu0 0
          %321 = vmatpush2.bf16.msra.mxu0 0
          %322 = vmatprep.subr.bf16.mxu0 0
          %323 = vmatpush2.bf16.msra.mxu0 0
          %324 = vmatprep.mubr.bf16.mxu0 0
          %325 = vmatmul.mubr.bf16.gmra.mxu0 %v290
          %v326 = vpop.f32.mrf.mxu0
          %v327 = vadd.f32 0.0, %v326
          %v328 = vpop.f32.mrf.mxu0
          %v329 = vpop.f32.mrf.mxu0
          %v330 = vpop.f32.mrf.mxu0
          %331 = vdwg.mxu0
          %v332 = vpack.c.bf16 %v327, %v327
          %vm333 = vcmask 519168
          %334 = vst.msk [vmem:[#allocation2] sm:$0xf] %vm333, %v332
          %s335 = scalar_lea.vmem [#allocation8], 16
          %v336 = vld [vmem:[%s335] sm:$0xf]
          %v337 = vld [vmem:[%s335 + $0x4] sm:$0xf]
          %v338 = vld [vmem:[%s335 + $0x8] sm:$0xf]
          %v339 = vld [vmem:[%s335 + $0xc] sm:$0xf]
          %v344 = vunpack.c.l.b16 %v336
          %v345 = vunpack.c.l.b16 %v337
          %v346 = vunpack.c.l.b16 %v338
          %v347 = vunpack.c.l.b16 %v339
          %v348 = vpack.c.b16 %v345, %v344
          %v349 = vpack.c.b16 %v347, %v346
          %352 = vmatprep.subr.bf16.mxu0 0
          %353 = vmatpush1.bf16.msra.mxu0 0
          %354 = vmatprep.subr.bf16.mxu0 0
          %355 = vmatpush1.bf16.msra.mxu0 0
          %356 = vmatprep.subr.bf16.mxu0 0
          %357 = vmatpush1.bf16.msra.mxu0 0
          %358 = vmatprep.subr.bf16.mxu0 0
          %359 = vmatpush1.bf16.msra.mxu0 0
          %360 = vmatprep.subr.bf16.mxu0 0
          %361 = vmatpush1.bf16.msra.mxu0 0
          %362 = vmatprep.subr.bf16.mxu0 0
          %363 = vmatpush1.bf16.msra.mxu0 0
          %364 = vmatprep.subr.bf16.mxu0 0
          %365 = vmatpush1.bf16.msra.mxu0 %v349
          %366 = vmatprep.subr.bf16.mxu0 0
          %367 = vmatpush1.bf16.msra.mxu0 %v348
          %368 = vmatprep.subr.bf16.mxu0 0
          %369 = vmatpush2.bf16.msra.mxu0 0
          %370 = vmatprep.subr.bf16.mxu0 0
          %371 = vmatpush2.bf16.msra.mxu0 0
          %372 = vmatprep.subr.bf16.mxu0 0
          %373 = vmatpush2.bf16.msra.mxu0 0
          %374 = vmatprep.subr.bf16.mxu0 0
          %375 = vmatpush2.bf16.msra.mxu0 0
          %376 = vmatprep.subr.bf16.mxu0 0
          %377 = vmatpush2.bf16.msra.mxu0 0
          %378 = vmatprep.subr.bf16.mxu0 0
          %379 = vmatpush2.bf16.msra.mxu0 0
          %380 = vmatprep.subr.bf16.mxu0 0
          %381 = vmatpush2.bf16.msra.mxu0 0
          %382 = vmatprep.subr.bf16.mxu0 0
          %383 = vmatpush2.bf16.msra.mxu0 0
          %384 = vmatprep.mubr.bf16.mxu0 0
          %385 = vmatmul.mubr.bf16.gmra.mxu0 %v290
          %v386 = vpop.f32.mrf.mxu0
          %v387 = vadd.f32 0.0, %v386
          %v388 = vpop.f32.mrf.mxu0
          %v389 = vpop.f32.mrf.mxu0
          %v390 = vpop.f32.mrf.mxu0
          %391 = vdwg.mxu0
          %v392 = vpack.c.bf16 %v387, %v387
          %393 = vst.msk [vmem:[#allocation2 + $0x4] sm:$0xf] %vm333, %v392
          %s394 = scalar_lea.vmem [#allocation8], 32
          %v395 = vld [vmem:[%s394] sm:$0xf]
          %v396 = vld [vmem:[%s394 + $0x4] sm:$0xf]
          %v397 = vld [vmem:[%s394 + $0x8] sm:$0xf]
          %v398 = vld [vmem:[%s394 + $0xc] sm:$0xf]
          %v403 = vunpack.c.l.b16 %v395
          %v404 = vunpack.c.l.b16 %v396
          %v405 = vunpack.c.l.b16 %v397
          %v406 = vunpack.c.l.b16 %v398
          %v407 = vpack.c.b16 %v404, %v403
          %v408 = vpack.c.b16 %v406, %v405
          %411 = vmatprep.subr.bf16.mxu0 0
          %412 = vmatpush1.bf16.msra.mxu0 0
          %413 = vmatprep.subr.bf16.mxu0 0
          %414 = vmatpush1.bf16.msra.mxu0 0
          %415 = vmatprep.subr.bf16.mxu0 0
          %416 = vmatpush1.bf16.msra.mxu0 0
          %417 = vmatprep.subr.bf16.mxu0 0
          %418 = vmatpush1.bf16.msra.mxu0 0
          %419 = vmatprep.subr.bf16.mxu0 0
          %420 = vmatpush1.bf16.msra.mxu0 0
          %421 = vmatprep.subr.bf16.mxu0 0
          %422 = vmatpush1.bf16.msra.mxu0 0
          %423 = vmatprep.subr.bf16.mxu0 0
          %424 = vmatpush1.bf16.msra.mxu0 %v408
          %425 = vmatprep.subr.bf16.mxu0 0
          %426 = vmatpush1.bf16.msra.mxu0 %v407
          %427 = vmatprep.subr.bf16.mxu0 0
          %428 = vmatpush2.bf16.msra.mxu0 0
          %429 = vmatprep.subr.bf16.mxu0 0
          %430 = vmatpush2.bf16.msra.mxu0 0
          %431 = vmatprep.subr.bf16.mxu0 0
          %432 = vmatpush2.bf16.msra.mxu0 0
          %433 = vmatprep.subr.bf16.mxu0 0
          %434 = vmatpush2.bf16.msra.mxu0 0
          %435 = vmatprep.subr.bf16.mxu0 0
          %436 = vmatpush2.bf16.msra.mxu0 0
          %437 = vmatprep.subr.bf16.mxu0 0
          %438 = vmatpush2.bf16.msra.mxu0 0
          %439 = vmatprep.subr.bf16.mxu0 0
          %440 = vmatpush2.bf16.msra.mxu0 0
          %441 = vmatprep.subr.bf16.mxu0 0
          %442 = vmatpush2.bf16.msra.mxu0 0
          %443 = vmatprep.mubr.bf16.mxu0 0
          %444 = vmatmul.mubr.bf16.gmra.mxu0 %v290
          %v445 = vpop.f32.mrf.mxu0
          %v446 = vadd.f32 0.0, %v445
          %v447 = vpop.f32.mrf.mxu0
          %v448 = vpop.f32.mrf.mxu0
          %v449 = vpop.f32.mrf.mxu0
          %450 = vdwg.mxu0
          %v451 = vpack.c.bf16 %v446, %v446
          %452 = vst.msk [vmem:[#allocation2 + $0x8] sm:$0xf] %vm333, %v451
          %v453 = vld [vmem:[%s3] sm:$0xf]
          %454 = vst.msk [vmem:[#allocation2 + $0xc] sm:$0xf] %vm333, %v453
        $region52: #{tpu_custom_call.1} parent=35 // pred_fallthru
          _
        %v455 = vld [vmem:[#allocation6] sm:$0xf]
        %v456 = vld [vmem:[#allocation6 + $0x4] sm:$0xf]
        %v457 = vld [vmem:[#allocation2] sm:$0xf]
        %v458 = vld [vmem:[#allocation2 + $0x4] sm:$0xf]
        %v459 = vld [vmem:[#allocation2 + $0x8] sm:$0xf]
        %v460 = vld [vmem:[#allocation2 + $0xc] sm:$0xf]
        %v463 = vunpack.c.l.b16 %v455
        %v464 = vunpack.c.l.b16 %v456
        %v465 = vpack.c.b16 %v464, %v463
        %v470 = vunpack.c.l.b16 %v457
        %v471 = vunpack.c.l.b16 %v458
        %v472 = vunpack.c.l.b16 %v459
        %v473 = vunpack.c.l.b16 %v460
        %v474 = vpack.c.b16 %v471, %v470
        %v475 = vpack.c.b16 %v473, %v472
        %vm478 = vcmask 261120
        %v480 = vsel %vm478, %v465, 0
        %482 = vmatprep.subr.bf16.mxu0 0
        %483 = vmatpush1.bf16.msra.mxu0 0
        %484 = vmatprep.subr.bf16.mxu0 0
        %485 = vmatpush1.bf16.msra.mxu0 0
        %486 = vmatprep.subr.bf16.mxu0 0
        %487 = vmatpush1.bf16.msra.mxu0 0
        %488 = vmatprep.subr.bf16.mxu0 0
        %489 = vmatpush1.bf16.msra.mxu0 0
        %490 = vmatprep.subr.bf16.mxu0 0
        %491 = vmatpush1.bf16.msra.mxu0 0
        %492 = vmatprep.subr.bf16.mxu0 0
        %493 = vmatpush1.bf16.msra.mxu0 0
        %494 = vmatprep.subr.bf16.mxu0 0
        %495 = vmatpush1.bf16.msra.mxu0 %v475
        %496 = vmatprep.subr.bf16.mxu0 0
        %497 = vmatpush1.bf16.msra.mxu0 %v474
        %498 = vmatprep.subr.bf16.mxu0 0
        %499 = vmatpush2.bf16.msra.mxu0 0
        %500 = vmatprep.subr.bf16.mxu0 0
        %501 = vmatpush2.bf16.msra.mxu0 0
        %502 = vmatprep.subr.bf16.mxu0 0
        %503 = vmatpush2.bf16.msra.mxu0 0
        %504 = vmatprep.subr.bf16.mxu0 0
        %505 = vmatpush2.bf16.msra.mxu0 0
        %506 = vmatprep.subr.bf16.mxu0 0
        %507 = vmatpush2.bf16.msra.mxu0 0
        %508 = vmatprep.subr.bf16.mxu0 0
        %509 = vmatpush2.bf16.msra.mxu0 0
        %510 = vmatprep.subr.bf16.mxu0 0
        %511 = vmatpush2.bf16.msra.mxu0 0
        %512 = vmatprep.subr.bf16.mxu0 0
        %513 = vmatpush2.bf16.msra.mxu0 0
        %514 = vmatprep.mubr.bf16.mxu0 0
        %515 = vmatmul.mubr.bf16.gmra.mxu0 %v480
        %v516 = vpop.f32.mrf.mxu0
        %v517 = vadd.f32 0.0, %v516
        %v518 = vpop.f32.mrf.mxu0
        %v519 = vpop.f32.mrf.mxu0
        %v520 = vadd.f32 0.0, %v519
        %v521 = vpop.f32.mrf.mxu0
        %522 = vdwg.mxu0
        %vm523 = vcmask 523264
        %524 = vst.msk [vmem:[%s263] sm:$0xff] %vm523, %v517
        %525 = vst.msk [vmem:[%s263 + $0x8] sm:$0xff] %vm523, %v520
        %s526 = sand.u32 %s138, 1
        %s527 = scalar_lea.sflag [#allocation5], %s526
        %s528 = sand.u32 %s138, 1
        %s529 = smul.addr %s528, 16
        %s530 = scalar_lea.vmem [#allocation9], %s529
        // Predicated region
        $region53: #{tpu_custom_call.1} parent=35 // pred_check
          %p531 = pneg %p148
        $region54: #{tpu_custom_call.1} parent=35 // pred_check_branch
          %533 = sbr.rel (%p531) target = $region56
        $region55: #{tpu_custom_call.1} parent=35 // pred_region
          %s534 = smul.u32 2, %s27
          %s536 = ssub.s32 256, 256
          %537 = vsyncadd %s527, %s536
          %s538 = smul.addr %s26, 2
          %s539 = sadd.s32 %s534, %s538
          %s540 = smul.addr %s539, 128
          %s541 = scalar_lea.hbm %s4, %s540
          %s542 = sshll.u32 %s530, 4
          %s543 = int_to_ptr.vmem [resolvable:$true] %s542
          %548 = dma.vmem_to_hbm [thread:$0]  %s543, 256, %s541, %s527, 128, 128, 8
        $region56: #{tpu_custom_call.1} parent=35 // pred_fallthru
          _
      $region36: #{tpu_custom_call.1} parent=5 // pred_fallthru
        _
      %p549 = scmp.le.s32.totalorder 2, %s17
      // Predicated region
      $region57: #{tpu_custom_call.1} parent=5 // pred_check
        %p550 = pneg %p549
      $region58: #{tpu_custom_call.1} parent=5 // pred_check_branch
        %552 = sbr.rel (%p550) target = $region60
      $region59: #{tpu_custom_call.1} parent=5 // pred_region
        %s553 = ssub.s32 %s17, 2
        // Predicated region
        $region61: #{tpu_custom_call.1} parent=59 // pred_check
          %p554 = pneg %p154
        $region62: #{tpu_custom_call.1} parent=59 // pred_check_branch
          %556 = sbr.rel (%p554) target = $region64
        $region63: #{tpu_custom_call.1} parent=59 // pred_region
          %s557 = sand.u32 %s139, 1
          %s558 = scalar_lea.sflag [#allocation5], %s557
          %s559 = sand.u32 %s139, 1
          %s560 = smul.addr %s559, 16
          %s561 = scalar_lea.vmem [#allocation9], %s560
          %562 = dma.done %s558, 256
        $region64: #{tpu_custom_call.1} parent=59 // pred_fallthru
          _
      $region60: #{tpu_custom_call.1} parent=5 // pred_fallthru
        _
    $region6: #{tpu_custom_call.1} parent=1 // loop_footer
      %s21 = sadd.s32 1, %s17
    $region7: #{tpu_custom_call.1} parent=1 // loop_footer_branch
      %16 = sbr.rel target = $region3
    $region8: #{tpu_custom_call.1} parent=1 // loop_exit
      _
    %563 = vsyncpa [#allocation4], 1
    %s564 = scalar_lea.sflag [#allocation4], 1
    %565 = vsyncpa %s564, 1
    %566 = vsyncpa [#allocation7], 1
    %567 = vsyncpa [#allocation5], 1
    %s568 = scalar_lea.sflag [#allocation5], 1
    %569 = vsyncpa %s568, 1

</llo_original>
